<compile_context>
chip_gen: v7x
topology: tpu7x:2x2x1
jax: 0.10.0
libtpu: 0.0.40
codegen_flags: <defaults>
</compile_context>

<pallas_src>
import functools

import jax
import jax.numpy as jnp
from jax import lax
from jax.experimental import pallas as pl
from jax.experimental.pallas import tpu as pltpu


def _res_conv_kernel(x_ref, w_ref, b_ref, o_ref, pad_ref, slab_ref, *, W, L):
    """Folded (branch-summed) 3x3 conv + bias + identity for all N images.

    x_ref   : (N, C, HW)    f32  input, channel-major, spatial flattened.
    w_ref   : (C, 9*C)      f32  folded weights; column order (dy*3+dx)*C + cin.
    b_ref   : (C, 1)        f32  folded bias.
    o_ref   : (N, C, HW)    f32  output.
    pad_ref : (N, C, S)     f32  scratch: flat spatial with zero halos, image data
                                 starting at lane offset L (128-aligned); S = L+HW+W+1.
    slab_ref: (9*C, N*HW)   f32  scratch im2col slab (taps on sublanes, images on lanes).
    """
    N, C, HW = x_ref.shape
    S = pad_ref.shape[-1]
    base = L - (W + 1)                                 # lane offset of the (dy=0,dx=0) tap

    # ---- Fused padding: zero the halo buffer, aligned center write (no wrapper pad).
    x = x_ref[...]                                     # (N, C, HW) f32
    pad_ref[...] = jnp.zeros_like(pad_ref)
    pad_ref[:, :, L:L + HW] = x                        # L and HW are multiples of 128
    xc = pad_ref[...]                                  # (N, C, S)

    # ---- Column masks applied ONCE to the whole buffer (not per tap). -------------
    # In the row-major flat layout, a dx=0 (dx=2) tap would wrap into the previous
    # (next) image row at output column 0 (W-1); those source lanes are pre-zeroed.
    # (v5e note: these selects are f32, so no bf16-VPU dependence.)
    pos = lax.broadcasted_iota(jnp.int32, (1, 1, S), 2)
    xl = jnp.where(pos % W != (L - 1) % W, xc, 0.0)    # source for dx == 0 taps
    xr = jnp.where(pos % W != L % W, xc, 0.0)          # source for dx == 2 taps
    srcs = (xl, xc, xr)

    # ---- Build the (9*C, N*HW) im2col slab. ----------------------------------------
    # Every tap is a static lane-shifted slice of the halo buffer; it is stored at a
    # static row block (tap-major) and a 128-aligned lane block (image-major).
    for n in range(N):
        for dy in range(3):
            for dx in range(3):
                t = dy * 3 + dx
                start = base + dy * W + dx
                slab_ref[t * C:(t + 1) * C, n * HW:(n + 1) * HW] = (
                    srcs[dx][n, :, start:start + HW])

    # ---- One MXU dot with K = 9*C instead of nine K=C dots + 8 VPU adds. ----------
    acc = jnp.dot(w_ref[...], slab_ref[...],
                  preferred_element_type=jnp.float32)  # (C, N*HW) f32

    # ---- Identity branch (nn.Identity()) + folded bias, exact f32; lane-dense store.
    bias = b_ref[...]                                  # (C, 1)
    for n in range(N):
        o_ref[n] = (acc[:, n * HW:(n + 1) * HW] + bias + x[n]).astype(o_ref.dtype)


@jax.jit
def base_res_layer(x_nchw, weights, biases):
    """x_nchw: (N, C, H, W) f32; weights: (NB, Cout, Cin, 3, 3); biases: (NB, Cout)."""
    N, C, H, W = x_nchw.shape
    HW = H * W
    # Left halo rounded up to a lane tile so the in-kernel center write is aligned.
    L = ((W + 1 + 127) // 128) * 128
    S = L + HW + W + 1                                 # right halo covers the (dy=2,dx=2) tap

    # Fold the conv branches: sum_i conv(x; w_i, b_i) == conv(x; sum_i w_i, sum_i b_i).
    w_sum = weights.sum(axis=0)                        # (Cout, Cin, 3, 3)
    b_sum = biases.sum(axis=0)                         # (Cout,)
    # (Cout, Cin, ky, kx) -> (Cout, (ky*3+kx)*Cin + cin): matches the slab row order.
    w_taps = jnp.transpose(w_sum, (0, 2, 3, 1)).reshape(C, 9 * C).astype(jnp.float32)
    b_col = b_sum.reshape(C, 1).astype(jnp.float32)

    # Contiguous reshape only (metadata-level); no pad / transpose ops outside the kernel.
    x_flat = x_nchw.reshape(N, C, HW)

    kernel = functools.partial(_res_conv_kernel, W=W, L=L)
    out_flat = pl.pallas_call(
        kernel,
        out_shape=jax.ShapeDtypeStruct((N, C, HW), x_nchw.dtype),
        grid=(1,),                       # single step: N folded onto the lane axis
        in_specs=[
            pl.BlockSpec((N, C, HW), lambda i: (0, 0, 0)),
            pl.BlockSpec((C, 9 * C), lambda i: (0, 0)),
            pl.BlockSpec((C, 1), lambda i: (0, 0)),
        ],
        out_specs=pl.BlockSpec((N, C, HW), lambda i: (0, 0, 0)),
        scratch_shapes=[
            pltpu.VMEM((N, C, S), jnp.float32),        # halo-padded input
            pltpu.VMEM((9 * C, N * HW), jnp.float32),  # im2col slab
        ],
        compiler_params=pltpu.CompilerParams(
            dimension_semantics=("arbitrary",)),
    )(x_flat, w_taps, b_col)

    # TODO(synk): on v7x (2 TensorCores), optionally switch back to grid=(N,) with
    # "parallel" semantics once per-image work is large enough to amortize the prologue.
    # TODO(synk): for large H/W/C add an H-tile grid axis with halo rows via the
    # index_map and budget blocks against v7x's 64 MiB VMEM (set vmem_limit_bytes).
    return out_flat.reshape(N, C, H, W)


def _reference(x_nchw, weights, biases):
    """Pure-JAX reference: sum of two 3x3 convs (padding=1) plus identity."""
    res = x_nchw
    for br in range(weights.shape[0]):
        conv = lax.conv_general_dilated(
            x_nchw, weights[br], window_strides=(1, 1), padding=((1, 1), (1, 1)),
            dimension_numbers=("NCHW", "OIHW", "NCHW"))
        res = res + conv + biases[br][None, :, None, None]
    return res


if __name__ == "__main__":
    key = jax.random.PRNGKey(0)
    k_x, k_w, k_b = jax.random.split(key, 3)

    N, C, H, W = 2, 4, 16, 16
    NB = 2  # number of conv branches in `models` (plus one identity branch)

    x = jax.random.normal(k_x, (N, C, H, W), dtype=jnp.float32)
    # Deterministic synthetic parameters (Conv2d(C, C, 3) shapes: (Cout, Cin, 3, 3)).
    weights = 0.1 * jax.random.normal(k_w, (NB, C, C, 3, 3), dtype=jnp.float32)
    biases = 0.1 * jax.random.normal(k_b, (NB, C), dtype=jnp.float32)

    out = base_res_layer(x, weights, biases)
    out = jax.block_until_ready(out)

    ref = _reference(x, weights, biases)
    assert out.shape == (N, C, H, W)
    # f32 path is typically ~1e-5 off the reference; tolerance kept conservative in
    # case the MXU runs the f32 dot in a reduced-pass mode on some chips.
    assert jnp.allclose(out, ref, atol=3e-2, rtol=3e-2), "mismatch vs reference"

    print("KERNEL_OK")
</pallas_src>

<mosaic_0001>
module attributes {stable_mosaic.version = 11 : i64} {
  func.func @_res_conv_kernel(%arg0: i32, %arg1: memref<2x4x256xf32, #tpu.memory_space<vmem>>, %arg2: memref<4x36xf32, #tpu.memory_space<vmem>>, %arg3: memref<4x1xf32, #tpu.memory_space<vmem>>, %arg4: memref<2x4x256xf32, #tpu.memory_space<vmem>>, %arg5: memref<2x4x401xf32, #tpu.memory_space<vmem>>, %arg6: memref<36x512xf32, #tpu.memory_space<vmem>>) attributes {dimension_semantics = [#tpu.dimension_semantics<arbitrary>], iteration_bounds = array<i64: 1>, scalar_prefetch = 0 : i64, scratch_operands = 2 : i64, tpu.core_type = #tpu.core_type<tc>, window_params = [{pipeline_mode = #tpu.pipeline_mode<synchronous>, transform_indices = @transform_0, window_bounds = array<i64: 2, 4, 256>}, {pipeline_mode = #tpu.pipeline_mode<synchronous>, transform_indices = @transform_1, window_bounds = array<i64: 4, 36>}, {pipeline_mode = #tpu.pipeline_mode<synchronous>, transform_indices = @transform_2, window_bounds = array<i64: 4, 1>}, {pipeline_mode = #tpu.pipeline_mode<synchronous>, transform_indices = @transform_3, window_bounds = array<i64: 2, 4, 256>}]} {
    %c0 = arith.constant 0 : index
    %c0_0 = arith.constant 0 : index
    %c0_1 = arith.constant 0 : index
    %0 = vector.load %arg1[%c0, %c0_0, %c0_1] : memref<2x4x256xf32, #tpu.memory_space<vmem>>, vector<2x4x256xf32>
    %cst = arith.constant 0.000000e+00 : f32
    %1 = vector.broadcast %cst : f32 to vector<2x4x401xf32>
    %c0_2 = arith.constant 0 : index
    %c0_3 = arith.constant 0 : index
    %c0_4 = arith.constant 0 : index
    %2 = vector.load %arg5[%c0_2, %c0_3, %c0_4] : memref<2x4x401xf32, #tpu.memory_space<vmem>>, vector<2x4x401xf32>
    tpu.vector_store %arg5[%c0_2, %c0_3, %c0_4], %1 {strides = array<i32>} : memref<2x4x401xf32, #tpu.memory_space<vmem>>, vector<2x4x401xf32>,
    %c0_5 = arith.constant 0 : index
    %c0_6 = arith.constant 0 : index
    %c128 = arith.constant 128 : index
    %3 = vector.load %arg5[%c0_5, %c0_6, %c128] : memref<2x4x401xf32, #tpu.memory_space<vmem>>, vector<2x4x256xf32>
    tpu.vector_store %arg5[%c0_5, %c0_6, %c128], %0 {strides = array<i32>} : memref<2x4x401xf32, #tpu.memory_space<vmem>>, vector<2x4x256xf32>,
    %c0_7 = arith.constant 0 : index
    %c0_8 = arith.constant 0 : index
    %c0_9 = arith.constant 0 : index
    %4 = vector.load %arg5[%c0_7, %c0_8, %c0_9] : memref<2x4x401xf32, #tpu.memory_space<vmem>>, vector<2x4x401xf32>
    %5 = tpu.iota {dimensions = array<i32: 2>} : vector<1x1x401xi32>
    %c16_i32 = arith.constant 16 : i32
    %c0_i32 = arith.constant 0 : i32
    %6 = arith.cmpi eq, %c16_i32, %c0_i32 : i32
    %c1_i32 = arith.constant 1 : i32
    %7 = arith.select %6, %c1_i32, %c16_i32 : i32
    %8 = vector.broadcast %7 : i32 to vector<1x1x401xi32>
    %9 = arith.remsi %5, %8 : vector<1x1x401xi32>
    %c0_i32_10 = arith.constant 0 : i32
    %10 = vector.broadcast %c0_i32_10 : i32 to vector<1x1x401xi32>
    %11 = arith.cmpi ne, %9, %10 : vector<1x1x401xi32>
    %c0_i32_11 = arith.constant 0 : i32
    %12 = vector.broadcast %c0_i32_11 : i32 to vector<1x1x401xi32>
    %13 = arith.cmpi slt, %9, %12 : vector<1x1x401xi32>
    %c0_i32_12 = arith.constant 0 : i32
    %14 = arith.cmpi slt, %7, %c0_i32_12 : i32
    %15 = vector.broadcast %14 : i1 to vector<1x1x401xi1>
    %16 = vector.broadcast %15 : vector<1x1x401xi1> to vector<1x1x401xi1>
    %17 = arith.xori %13, %16 : vector<1x1x401xi1>
    %18 = arith.andi %17, %11 : vector<1x1x401xi1>
    %19 = vector.broadcast %7 : i32 to vector<1x1x401xi32>
    %20 = arith.addi %9, %19 : vector<1x1x401xi32>
    %21 = arith.select %18, %20, %9 : vector<1x1x401xi1>, vector<1x1x401xi32>
    %c15_i32 = arith.constant 15 : i32
    %22 = vector.broadcast %c15_i32 : i32 to vector<1x1x401xi32>
    %23 = arith.cmpi ne, %21, %22 : vector<1x1x401xi32>
    %cst_13 = arith.constant 0.000000e+00 : f32
    %24 = vector.shape_cast %23 : vector<1x1x401xi1> to vector<1x1x401xi1>
    %25 = vector.broadcast %24 : vector<1x1x401xi1> to vector<2x4x401xi1>
    %26 = vector.broadcast %cst_13 : f32 to vector<2x4x401xf32>
    %27 = arith.select %25, %4, %26 : vector<2x4x401xi1>, vector<2x4x401xf32>
    %c16_i32_14 = arith.constant 16 : i32
    %c0_i32_15 = arith.constant 0 : i32
    %28 = arith.cmpi eq, %c16_i32_14, %c0_i32_15 : i32
    %c1_i32_16 = arith.constant 1 : i32
    %29 = arith.select %28, %c1_i32_16, %c16_i32_14 : i32
    %30 = vector.broadcast %29 : i32 to vector<1x1x401xi32>
    %31 = arith.remsi %5, %30 : vector<1x1x401xi32>
    %c0_i32_17 = arith.constant 0 : i32
    %32 = vector.broadcast %c0_i32_17 : i32 to vector<1x1x401xi32>
    %33 = arith.cmpi ne, %31, %32 : vector<1x1x401xi32>
    %c0_i32_18 = arith.constant 0 : i32
    %34 = vector.broadcast %c0_i32_18 : i32 to vector<1x1x401xi32>
    %35 = arith.cmpi slt, %31, %34 : vector<1x1x401xi32>
    %c0_i32_19 = arith.constant 0 : i32
    %36 = arith.cmpi slt, %29, %c0_i32_19 : i32
    %37 = vector.broadcast %36 : i1 to vector<1x1x401xi1>
    %38 = vector.broadcast %37 : vector<1x1x401xi1> to vector<1x1x401xi1>
    %39 = arith.xori %35, %38 : vector<1x1x401xi1>
    %40 = arith.andi %39, %33 : vector<1x1x401xi1>
    %41 = vector.broadcast %29 : i32 to vector<1x1x401xi32>
    %42 = arith.addi %31, %41 : vector<1x1x401xi32>
    %43 = arith.select %40, %42, %31 : vector<1x1x401xi1>, vector<1x1x401xi32>
    %c0_i32_20 = arith.constant 0 : i32
    %44 = vector.broadcast %c0_i32_20 : i32 to vector<1x1x401xi32>
    %45 = arith.cmpi ne, %43, %44 : vector<1x1x401xi32>
    %cst_21 = arith.constant 0.000000e+00 : f32
    %46 = vector.shape_cast %45 : vector<1x1x401xi1> to vector<1x1x401xi1>
    %47 = vector.broadcast %46 : vector<1x1x401xi1> to vector<2x4x401xi1>
    %48 = vector.broadcast %cst_21 : f32 to vector<2x4x401xf32>
    %49 = arith.select %47, %4, %48 : vector<2x4x401xi1>, vector<2x4x401xf32>
    %50 = vector.extract_strided_slice %27 {offsets = [0, 0, 111], sizes = [1, 4, 256], strides = [1, 1, 1]} : vector<2x4x401xf32> to vector<1x4x256xf32>
    %51 = vector.shape_cast %50 : vector<1x4x256xf32> to vector<4x256xf32>
    %c0_22 = arith.constant 0 : index
    %c0_23 = arith.constant 0 : index
    %52 = vector.load %arg6[%c0_22, %c0_23] : memref<36x512xf32, #tpu.memory_space<vmem>>, vector<4x256xf32>
    tpu.vector_store %arg6[%c0_22, %c0_23], %51 {strides = array<i32>} : memref<36x512xf32, #tpu.memory_space<vmem>>, vector<4x256xf32>,
    %53 = vector.extract_strided_slice %4 {offsets = [0, 0, 112], sizes = [1, 4, 256], strides = [1, 1, 1]} : vector<2x4x401xf32> to vector<1x4x256xf32>
    %54 = vector.shape_cast %53 : vector<1x4x256xf32> to vector<4x256xf32>
    %c4 = arith.constant 4 : index
    %c0_24 = arith.constant 0 : index
    %55 = vector.load %arg6[%c4, %c0_24] : memref<36x512xf32, #tpu.memory_space<vmem>>, vector<4x256xf32>
    tpu.vector_store %arg6[%c4, %c0_24], %54 {strides = array<i32>} : memref<36x512xf32, #tpu.memory_space<vmem>>, vector<4x256xf32>,
    %56 = vector.extract_strided_slice %49 {offsets = [0, 0, 113], sizes = [1, 4, 256], strides = [1, 1, 1]} : vector<2x4x401xf32> to vector<1x4x256xf32>
    %57 = vector.shape_cast %56 : vector<1x4x256xf32> to vector<4x256xf32>
    %c8 = arith.constant 8 : index
    %c0_25 = arith.constant 0 : index
    %58 = vector.load %arg6[%c8, %c0_25] : memref<36x512xf32, #tpu.memory_space<vmem>>, vector<4x256xf32>
    tpu.vector_store %arg6[%c8, %c0_25], %57 {strides = array<i32>} : memref<36x512xf32, #tpu.memory_space<vmem>>, vector<4x256xf32>,
    %59 = vector.extract_strided_slice %27 {offsets = [0, 0, 127], sizes = [1, 4, 256], strides = [1, 1, 1]} : vector<2x4x401xf32> to vector<1x4x256xf32>
    %60 = vector.shape_cast %59 : vector<1x4x256xf32> to vector<4x256xf32>
    %c12 = arith.constant 12 : index
    %c0_26 = arith.constant 0 : index
    %61 = vector.load %arg6[%c12, %c0_26] : memref<36x512xf32, #tpu.memory_space<vmem>>, vector<4x256xf32>
    tpu.vector_store %arg6[%c12, %c0_26], %60 {strides = array<i32>} : memref<36x512xf32, #tpu.memory_space<vmem>>, vector<4x256xf32>,
    %62 = vector.extract_strided_slice %4 {offsets = [0, 0, 128], sizes = [1, 4, 256], strides = [1, 1, 1]} : vector<2x4x401xf32> to vector<1x4x256xf32>
    %63 = vector.shape_cast %62 : vector<1x4x256xf32> to vector<4x256xf32>
    %c16 = arith.constant 16 : index
    %c0_27 = arith.constant 0 : index
    %64 = vector.load %arg6[%c16, %c0_27] : memref<36x512xf32, #tpu.memory_space<vmem>>, vector<4x256xf32>
    tpu.vector_store %arg6[%c16, %c0_27], %63 {strides = array<i32>} : memref<36x512xf32, #tpu.memory_space<vmem>>, vector<4x256xf32>,
    %65 = vector.extract_strided_slice %49 {offsets = [0, 0, 129], sizes = [1, 4, 256], strides = [1, 1, 1]} : vector<2x4x401xf32> to vector<1x4x256xf32>
    %66 = vector.shape_cast %65 : vector<1x4x256xf32> to vector<4x256xf32>
    %c20 = arith.constant 20 : index
    %c0_28 = arith.constant 0 : index
    %67 = vector.load %arg6[%c20, %c0_28] : memref<36x512xf32, #tpu.memory_space<vmem>>, vector<4x256xf32>
    tpu.vector_store %arg6[%c20, %c0_28], %66 {strides = array<i32>} : memref<36x512xf32, #tpu.memory_space<vmem>>, vector<4x256xf32>,
    %68 = vector.extract_strided_slice %27 {offsets = [0, 0, 143], sizes = [1, 4, 256], strides = [1, 1, 1]} : vector<2x4x401xf32> to vector<1x4x256xf32>
    %69 = vector.shape_cast %68 : vector<1x4x256xf32> to vector<4x256xf32>
    %c24 = arith.constant 24 : index
    %c0_29 = arith.constant 0 : index
    %70 = vector.load %arg6[%c24, %c0_29] : memref<36x512xf32, #tpu.memory_space<vmem>>, vector<4x256xf32>
    tpu.vector_store %arg6[%c24, %c0_29], %69 {strides = array<i32>} : memref<36x512xf32, #tpu.memory_space<vmem>>, vector<4x256xf32>,
    %71 = vector.extract_strided_slice %4 {offsets = [0, 0, 144], sizes = [1, 4, 256], strides = [1, 1, 1]} : vector<2x4x401xf32> to vector<1x4x256xf32>
    %72 = vector.shape_cast %71 : vector<1x4x256xf32> to vector<4x256xf32>
    %c28 = arith.constant 28 : index
    %c0_30 = arith.constant 0 : index
    %73 = vector.load %arg6[%c28, %c0_30] : memref<36x512xf32, #tpu.memory_space<vmem>>, vector<4x256xf32>
    tpu.vector_store %arg6[%c28, %c0_30], %72 {strides = array<i32>} : memref<36x512xf32, #tpu.memory_space<vmem>>, vector<4x256xf32>,
    %74 = vector.extract_strided_slice %49 {offsets = [0, 0, 145], sizes = [1, 4, 256], strides = [1, 1, 1]} : vector<2x4x401xf32> to vector<1x4x256xf32>
    %75 = vector.shape_cast %74 : vector<1x4x256xf32> to vector<4x256xf32>
    %c32 = arith.constant 32 : index
    %c0_31 = arith.constant 0 : index
    %76 = vector.load %arg6[%c32, %c0_31] : memref<36x512xf32, #tpu.memory_space<vmem>>, vector<4x256xf32>
    tpu.vector_store %arg6[%c32, %c0_31], %75 {strides = array<i32>} : memref<36x512xf32, #tpu.memory_space<vmem>>, vector<4x256xf32>,
    %77 = vector.extract_strided_slice %27 {offsets = [1, 0, 111], sizes = [1, 4, 256], strides = [1, 1, 1]} : vector<2x4x401xf32> to vector<1x4x256xf32>
    %78 = vector.shape_cast %77 : vector<1x4x256xf32> to vector<4x256xf32>
    %c0_32 = arith.constant 0 : index
    %c256 = arith.constant 256 : index
    %79 = vector.load %arg6[%c0_32, %c256] : memref<36x512xf32, #tpu.memory_space<vmem>>, vector<4x256xf32>
    tpu.vector_store %arg6[%c0_32, %c256], %78 {strides = array<i32>} : memref<36x512xf32, #tpu.memory_space<vmem>>, vector<4x256xf32>,
    %80 = vector.extract_strided_slice %4 {offsets = [1, 0, 112], sizes = [1, 4, 256], strides = [1, 1, 1]} : vector<2x4x401xf32> to vector<1x4x256xf32>
    %81 = vector.shape_cast %80 : vector<1x4x256xf32> to vector<4x256xf32>
    %c4_33 = arith.constant 4 : index
    %c256_34 = arith.constant 256 : index
    %82 = vector.load %arg6[%c4_33, %c256_34] : memref<36x512xf32, #tpu.memory_space<vmem>>, vector<4x256xf32>
    tpu.vector_store %arg6[%c4_33, %c256_34], %81 {strides = array<i32>} : memref<36x512xf32, #tpu.memory_space<vmem>>, vector<4x256xf32>,
    %83 = vector.extract_strided_slice %49 {offsets = [1, 0, 113], sizes = [1, 4, 256], strides = [1, 1, 1]} : vector<2x4x401xf32> to vector<1x4x256xf32>
    %84 = vector.shape_cast %83 : vector<1x4x256xf32> to vector<4x256xf32>
    %c8_35 = arith.constant 8 : index
    %c256_36 = arith.constant 256 : index
    %85 = vector.load %arg6[%c8_35, %c256_36] : memref<36x512xf32, #tpu.memory_space<vmem>>, vector<4x256xf32>
    tpu.vector_store %arg6[%c8_35, %c256_36], %84 {strides = array<i32>} : memref<36x512xf32, #tpu.memory_space<vmem>>, vector<4x256xf32>,
    %86 = vector.extract_strided_slice %27 {offsets = [1, 0, 127], sizes = [1, 4, 256], strides = [1, 1, 1]} : vector<2x4x401xf32> to vector<1x4x256xf32>
    %87 = vector.shape_cast %86 : vector<1x4x256xf32> to vector<4x256xf32>
    %c12_37 = arith.constant 12 : index
    %c256_38 = arith.constant 256 : index
    %88 = vector.load %arg6[%c12_37, %c256_38] : memref<36x512xf32, #tpu.memory_space<vmem>>, vector<4x256xf32>
    tpu.vector_store %arg6[%c12_37, %c256_38], %87 {strides = array<i32>} : memref<36x512xf32, #tpu.memory_space<vmem>>, vector<4x256xf32>,
    %89 = vector.extract_strided_slice %4 {offsets = [1, 0, 128], sizes = [1, 4, 256], strides = [1, 1, 1]} : vector<2x4x401xf32> to vector<1x4x256xf32>
    %90 = vector.shape_cast %89 : vector<1x4x256xf32> to vector<4x256xf32>
    %c16_39 = arith.constant 16 : index
    %c256_40 = arith.constant 256 : index
    %91 = vector.load %arg6[%c16_39, %c256_40] : memref<36x512xf32, #tpu.memory_space<vmem>>, vector<4x256xf32>
    tpu.vector_store %arg6[%c16_39, %c256_40], %90 {strides = array<i32>} : memref<36x512xf32, #tpu.memory_space<vmem>>, vector<4x256xf32>,
    %92 = vector.extract_strided_slice %49 {offsets = [1, 0, 129], sizes = [1, 4, 256], strides = [1, 1, 1]} : vector<2x4x401xf32> to vector<1x4x256xf32>
    %93 = vector.shape_cast %92 : vector<1x4x256xf32> to vector<4x256xf32>
    %c20_41 = arith.constant 20 : index
    %c256_42 = arith.constant 256 : index
    %94 = vector.load %arg6[%c20_41, %c256_42] : memref<36x512xf32, #tpu.memory_space<vmem>>, vector<4x256xf32>
    tpu.vector_store %arg6[%c20_41, %c256_42], %93 {strides = array<i32>} : memref<36x512xf32, #tpu.memory_space<vmem>>, vector<4x256xf32>,
    %95 = vector.extract_strided_slice %27 {offsets = [1, 0, 143], sizes = [1, 4, 256], strides = [1, 1, 1]} : vector<2x4x401xf32> to vector<1x4x256xf32>
    %96 = vector.shape_cast %95 : vector<1x4x256xf32> to vector<4x256xf32>
    %c24_43 = arith.constant 24 : index
    %c256_44 = arith.constant 256 : index
    %97 = vector.load %arg6[%c24_43, %c256_44] : memref<36x512xf32, #tpu.memory_space<vmem>>, vector<4x256xf32>
    tpu.vector_store %arg6[%c24_43, %c256_44], %96 {strides = array<i32>} : memref<36x512xf32, #tpu.memory_space<vmem>>, vector<4x256xf32>,
    %98 = vector.extract_strided_slice %4 {offsets = [1, 0, 144], sizes = [1, 4, 256], strides = [1, 1, 1]} : vector<2x4x401xf32> to vector<1x4x256xf32>
    %99 = vector.shape_cast %98 : vector<1x4x256xf32> to vector<4x256xf32>
    %c28_45 = arith.constant 28 : index
    %c256_46 = arith.constant 256 : index
    %100 = vector.load %arg6[%c28_45, %c256_46] : memref<36x512xf32, #tpu.memory_space<vmem>>, vector<4x256xf32>
    tpu.vector_store %arg6[%c28_45, %c256_46], %99 {strides = array<i32>} : memref<36x512xf32, #tpu.memory_space<vmem>>, vector<4x256xf32>,
    %101 = vector.extract_strided_slice %49 {offsets = [1, 0, 145], sizes = [1, 4, 256], strides = [1, 1, 1]} : vector<2x4x401xf32> to vector<1x4x256xf32>
    %102 = vector.shape_cast %101 : vector<1x4x256xf32> to vector<4x256xf32>
    %c32_47 = arith.constant 32 : index
    %c256_48 = arith.constant 256 : index
    %103 = vector.load %arg6[%c32_47, %c256_48] : memref<36x512xf32, #tpu.memory_space<vmem>>, vector<4x256xf32>
    tpu.vector_store %arg6[%c32_47, %c256_48], %102 {strides = array<i32>} : memref<36x512xf32, #tpu.memory_space<vmem>>, vector<4x256xf32>,
    %c0_49 = arith.constant 0 : index
    %c0_50 = arith.constant 0 : index
    %104 = vector.load %arg2[%c0_49, %c0_50] : memref<4x36xf32, #tpu.memory_space<vmem>>, vector<4x36xf32>
    %c0_51 = arith.constant 0 : index
    %c0_52 = arith.constant 0 : index
    %105 = vector.load %arg6[%c0_51, %c0_52] : memref<36x512xf32, #tpu.memory_space<vmem>>, vector<36x512xf32>
    %cst_53 = arith.constant dense<0.000000e+00> : vector<4x512xf32>
    %106 = tpu.matmul %104, %105, %cst_53 {dimension_numbers = #tpu.dot_dimension_numbers<[1], [0], [0], [1], [0, 0, 1, 1], [], []>} : vector<4x36xf32>, vector<36x512xf32>, vector<4x512xf32> -> vector<4x512xf32>
    %c0_54 = arith.constant 0 : index
    %c0_55 = arith.constant 0 : index
    %107 = vector.load %arg3[%c0_54, %c0_55] : memref<4x1xf32, #tpu.memory_space<vmem>>, vector<4x1xf32>
    %108 = vector.extract_strided_slice %106 {offsets = [0, 0], sizes = [4, 256], strides = [1, 1]} : vector<4x512xf32> to vector<4x256xf32>
    %109 = vector.broadcast %107 : vector<4x1xf32> to vector<4x256xf32>
    %110 = arith.addf %108, %109 : vector<4x256xf32>
    %111 = vector.extract_strided_slice %0 {offsets = [0, 0, 0], sizes = [1, 4, 256], strides = [1, 1, 1]} : vector<2x4x256xf32> to vector<1x4x256xf32>
    %112 = vector.shape_cast %111 : vector<1x4x256xf32> to vector<4x256xf32>
    %113 = arith.addf %110, %112 : vector<4x256xf32>
    %c0_56 = arith.constant 0 : index
    %c0_57 = arith.constant 0 : index
    %c0_58 = arith.constant 0 : index
    %114 = vector.load %arg4[%c0_56, %c0_57, %c0_58] : memref<2x4x256xf32, #tpu.memory_space<vmem>>, vector<1x4x256xf32>
    %115 = vector.shape_cast %114 : vector<1x4x256xf32> to vector<4x256xf32>
    %116 = vector.shape_cast %113 : vector<4x256xf32> to vector<1x4x256xf32>
    tpu.vector_store %arg4[%c0_56, %c0_57, %c0_58], %116 {strides = array<i32>} : memref<2x4x256xf32, #tpu.memory_space<vmem>>, vector<1x4x256xf32>,
    %117 = vector.extract_strided_slice %106 {offsets = [0, 256], sizes = [4, 256], strides = [1, 1]} : vector<4x512xf32> to vector<4x256xf32>
    %118 = vector.broadcast %107 : vector<4x1xf32> to vector<4x256xf32>
    %119 = arith.addf %117, %118 : vector<4x256xf32>
    %120 = vector.extract_strided_slice %0 {offsets = [1, 0, 0], sizes = [1, 4, 256], strides = [1, 1, 1]} : vector<2x4x256xf32> to vector<1x4x256xf32>
    %121 = vector.shape_cast %120 : vector<1x4x256xf32> to vector<4x256xf32>
    %122 = arith.addf %119, %121 : vector<4x256xf32>
    %c1 = arith.constant 1 : index
    %c0_59 = arith.constant 0 : index
    %c0_60 = arith.constant 0 : index
    %123 = vector.load %arg4[%c1, %c0_59, %c0_60] : memref<2x4x256xf32, #tpu.memory_space<vmem>>, vector<1x4x256xf32>
    %124 = vector.shape_cast %123 : vector<1x4x256xf32> to vector<4x256xf32>
    %125 = vector.shape_cast %122 : vector<4x256xf32> to vector<1x4x256xf32>
    tpu.vector_store %arg4[%c1, %c0_59, %c0_60], %125 {strides = array<i32>} : memref<2x4x256xf32, #tpu.memory_space<vmem>>, vector<1x4x256xf32>,
    return
  }
  func.func @transform_0(%arg0: i32) -> (i32, i32, i32) {
    %c0_i32 = arith.constant 0 : i32
    %c0_i32_0 = arith.constant 0 : i32
    %c0_i32_1 = arith.constant 0 : i32
    %c0_i32_2 = arith.constant 0 : i32
    return %c0_i32, %c0_i32_0, %c0_i32_1 : i32, i32, i32
  }
  func.func @transform_1(%arg0: i32) -> (i32, i32) {
    %c0_i32 = arith.constant 0 : i32
    %c0_i32_0 = arith.constant 0 : i32
    %c0_i32_1 = arith.constant 0 : i32
    return %c0_i32, %c0_i32_0 : i32, i32
  }
  func.func @transform_2(%arg0: i32) -> (i32, i32) {
    %c0_i32 = arith.constant 0 : i32
    %c0_i32_0 = arith.constant 0 : i32
    %c0_i32_1 = arith.constant 0 : i32
    return %c0_i32, %c0_i32_0 : i32, i32
  }
  func.func @transform_3(%arg0: i32) -> (i32, i32, i32) {
    %c0_i32 = arith.constant 0 : i32
    %c0_i32_0 = arith.constant 0 : i32
    %c0_i32_1 = arith.constant 0 : i32
    %c0_i32_2 = arith.constant 0 : i32
    return %c0_i32, %c0_i32_0, %c0_i32_1 : i32, i32, i32
  }
}

</mosaic_0001>

<llo_original>
// kernel: base_res_layer.1
$region0: #{base_res_layer.1}
  #allocation0 [shape = 'u32[]', space=smem, size = 0x4, offset = 0x4, fixed_abs, tag = 'smem constant byte address 0x4 - core index']
  #allocation1 [shape = 'u32[144,128]{1,0:T(1,128)}', space=vmem, size = 0x12000, scoped, tag = 'internal scratch']
  #allocation2 [shape = 'f32[2,4,401]{2,1,0:T(4,128)}', space=vmem, size = 0x4000, scoped, tag = 'scratch operand']
  #allocation3 [shape = 'f32[36,512]{1,0:T(8,128)}', space=vmem, size = 0x14000, scoped, tag = 'scratch operand']
  %s0 = inlined_call_operand.vmem [shape: f32[2,4,256], index: 0, kind: input, shape index: {}]
  %s1 = inlined_call_operand.vmem [shape: f32[4,36], index: 1, kind: input, shape index: {}]
  %s2 = inlined_call_operand.vmem [shape: f32[4,1], index: 2, kind: input, shape index: {}]
  %s3 = inlined_call_operand.vmem [shape: f32[2,4,256], index: 3, kind: output, shape index: {}]
  %s4 = sld [smem:[#allocation0]]
  $region22: #{base_res_layer.1} parent=0
    _
  %s6 = ssub.s32 1, %s4
  %s7 = scalar_select 0, %s6, %s4
  // Predicated region
  $region2: #{base_res_layer.1} parent=0 // pred_check
    _
  $region3: #{base_res_layer.1} parent=0 // pred_check_branch
    %9 = sbr.rel (0) target = $region5
  $region4: #{base_res_layer.1} parent=0 // pred_region
    _
  $region5: #{base_res_layer.1} parent=0 // pred_fallthru
    _
  // Predicated region
  $region6: #{base_res_layer.1} parent=0 // pred_check
    _
  $region7: #{base_res_layer.1} parent=0 // pred_check_branch
    %11 = sbr.rel (0) target = $region9
  $region8: #{base_res_layer.1} parent=0 // pred_region
    _
  $region9: #{base_res_layer.1} parent=0 // pred_fallthru
    _
  // Predicated region
  $region10: #{base_res_layer.1} parent=0 // pred_check
    _
  $region11: #{base_res_layer.1} parent=0 // pred_check_branch
    %13 = sbr.rel (0) target = $region13
  $region12: #{base_res_layer.1} parent=0 // pred_region
    _
  $region13: #{base_res_layer.1} parent=0 // pred_fallthru
    _
  %v14 = vld [vmem:[%s0] sm:$0xff]
  %v15 = vld [vmem:[%s0 + $0x8] sm:$0xff]
  %16 = vst [vmem:[#allocation2] sm:$0xff] 0.0
  %vm17 = vcmask 1043456
  %vm18 = vcmask 138244
  %vm19 = vmor %vm18, %vm17
  %20 = vst.msk [vmem:[#allocation2 + $0x8] sm:$0xff] %vm19, 0.0
  %21 = vst [vmem:[#allocation2 + $0x10] sm:$0xff] 0.0
  %22 = vst.msk [vmem:[#allocation2 + $0x18] sm:$0xff] %vm19, 0.0
  %23 = vst [vmem:[#allocation2 + $0x4] sm:$0xff] %v14
  %24 = vst [vmem:[#allocation2 + $0x14] sm:$0xff] %v15
  %v25 = vld [vmem:[#allocation2] sm:$0xff]
  %v26 = vld [vmem:[#allocation2 + $0x8] sm:$0xff]
  %v27 = vld [vmem:[#allocation2 + $0x10] sm:$0xff]
  %v28 = vld [vmem:[#allocation2 + $0x18] sm:$0xff]
  %v29 = vlaneseq
  %v30 = vand.u32 %v29, 127
  %v31 = vadd.s32 %v30, 128
  %v32 = vadd.s32 %v30, 256
  %v33 = vadd.s32 %v30, 384
  %vm34 = vcmp.lt.s32.totalorder %v30, 0
  %v35 = vsub.s32 0, %v30
  %v36 = vsel %vm34, %v35, %v30
  %v37 = vshrl.u32 %v36, 4
  %v38 = vand.u32 %v36, 15
  %v39 = vsub.s32 0, %v38
  %v40 = vsel %vm34, %v39, %v38
  %vm41 = vcmp.lt.s32.totalorder %v31, 0
  %v42 = vsub.s32 0, %v31
  %v43 = vsel %vm41, %v42, %v31
  %v44 = vshrl.u32 %v43, 4
  %v45 = vand.u32 %v43, 15
  %v46 = vsub.s32 0, %v45
  %v47 = vsel %vm41, %v46, %v45
  %vm48 = vcmp.lt.s32.totalorder %v32, 0
  %v49 = vsub.s32 0, %v32
  %v50 = vsel %vm48, %v49, %v32
  %v51 = vshrl.u32 %v50, 4
  %v52 = vand.u32 %v50, 15
  %v53 = vsub.s32 0, %v52
  %v54 = vsel %vm48, %v53, %v52
  %vm55 = vcmp.lt.s32.totalorder %v33, 0
  %v56 = vsub.s32 0, %v33
  %v57 = vsel %vm55, %v56, %v33
  %v58 = vshrl.u32 %v57, 4
  %v59 = vand.u32 %v57, 15
  %v60 = vsub.s32 0, %v59
  %v61 = vsel %vm55, %v60, %v59
  %vm62 = vcmp.ne.s32.totalorder %v40, 0
  %vm63 = vcmp.ne.s32.totalorder %v47, 0
  %vm64 = vcmp.ne.s32.totalorder %v54, 0
  %vm65 = vcmp.ne.s32.totalorder %v61, 0
  %vm66 = vcmp.lt.s32.totalorder %v40, 0
  %vm67 = vcmp.lt.s32.totalorder %v47, 0
  %vm68 = vcmp.lt.s32.totalorder %v54, 0
  %vm69 = vcmp.lt.s32.totalorder %v61, 0
  %vm70 = vmand %vm66, %vm62
  %vm71 = vmand %vm67, %vm63
  %vm72 = vmand %vm68, %vm64
  %vm73 = vmand %vm69, %vm65
  %v74 = vadd.s32 %v40, 16
  %v75 = vadd.s32 %v47, 16
  %v76 = vadd.s32 %v54, 16
  %v77 = vadd.s32 %v61, 16
  %v78 = vsel %vm70, %v74, %v40
  %v79 = vsel %vm71, %v75, %v47
  %v80 = vsel %vm72, %v76, %v54
  %v81 = vsel %vm73, %v77, %v61
  %vm82 = vcmp.ne.s32.totalorder %v78, 15
  %vm83 = vcmp.ne.s32.totalorder %v79, 15
  %vm84 = vcmp.ne.s32.totalorder %v80, 15
  %vm85 = vcmp.ne.s32.totalorder %v81, 15
  %v86 = vsel %vm82, 1, 0
  %v87 = vsel %vm83, 1, 0
  %v88 = vsel %vm84, 1, 0
  %v89 = vsel %vm85, 1, 0
  %vm90 = vcmp.eq.s32.totalorder %v86, 1
  %vm91 = vcmp.eq.s32.totalorder %v87, 1
  %vm92 = vcmp.eq.s32.totalorder %v88, 1
  %vm93 = vcmp.eq.s32.totalorder %v89, 1
  %v98 = vcombine.high %v25, %v25
  %v99 = vcombine.high %v26, %v26
  %v100 = vcombine.high %v27, %v27
  %v101 = vcombine.high %v28, %v28
  %v106 = vsel %vm90, %v25, 0.0
  %v107 = vsel %vm91, %v98, 0.0
  %v108 = vsel %vm92, %v26, 0.0
  %v109 = vsel %vm93, %v99, 0.0
  %v110 = vsel %vm90, %v27, 0.0
  %v111 = vsel %vm91, %v100, 0.0
  %v112 = vsel %vm92, %v28, 0.0
  %v113 = vsel %vm93, %v101, 0.0
  %vm114 = vcmp.ne.s32.totalorder %v78, 0
  %vm115 = vcmp.ne.s32.totalorder %v79, 0
  %vm116 = vcmp.ne.s32.totalorder %v80, 0
  %vm117 = vcmp.ne.s32.totalorder %v81, 0
  %v118 = vsel %vm114, 1, 0
  %v119 = vsel %vm115, 1, 0
  %v120 = vsel %vm116, 1, 0
  %v121 = vsel %vm117, 1, 0
  %vm122 = vcmp.eq.s32.totalorder %v118, 1
  %vm123 = vcmp.eq.s32.totalorder %v119, 1
  %vm124 = vcmp.eq.s32.totalorder %v120, 1
  %vm125 = vcmp.eq.s32.totalorder %v121, 1
  %v126 = vsel %vm122, %v25, 0.0
  %v127 = vsel %vm123, %v98, 0.0
  %v128 = vsel %vm124, %v26, 0.0
  %v129 = vsel %vm125, %v99, 0.0
  %v130 = vsel %vm122, %v27, 0.0
  %v131 = vsel %vm123, %v100, 0.0
  %v132 = vsel %vm124, %v28, 0.0
  %v133 = vsel %vm125, %v101, 0.0
  %137 = vrot.lane.b32.xlu0 %v106, 17
  %v138 = vpop.permute.xlu0 %137
  %139 = vrot.lane.b32.xlu0 %v107, 17
  %v140 = vpop.permute.xlu0 %139
  %141 = vrot.lane.b32.xlu0 %v108, 17
  %v142 = vpop.permute.xlu0 %141
  %vm143 = vcmask 138240
  %v144 = vsel %vm143, %v138, %v140
  %v145 = vsel %vm143, %v140, %v142
  %148 = vst [vmem:[#allocation3] sm:$0xf] %v144
  %149 = vst [vmem:[#allocation3 + $0x8] sm:$0xf] %v145
  %v150 = vcombine.low %v25, %v25
  %v151 = vcombine.low %v26, %v26
  %152 = vrot.lane.b32.xlu0 %v150, 16
  %v153 = vpop.permute.xlu0 %152
  %154 = vrot.lane.b32.xlu0 %v25, 16
  %v155 = vpop.permute.xlu0 %154
  %156 = vrot.lane.b32.xlu0 %v151, 16
  %v157 = vpop.permute.xlu0 %156
  %vm158 = vcmask 130048
  %v159 = vsel %vm158, %v153, %v155
  %v160 = vsel %vm158, %v155, %v157
  %163 = vst [vmem:[#allocation3] sm:$0xf0] %v159
  %164 = vst [vmem:[#allocation3 + $0x8] sm:$0xf0] %v160
  %168 = vrot.lane.b32.xlu0 %v126, 15
  %v169 = vpop.permute.xlu0 %168
  %170 = vrot.lane.b32.xlu0 %v127, 15
  %v171 = vpop.permute.xlu0 %170
  %172 = vrot.lane.b32.xlu0 %v128, 15
  %v173 = vpop.permute.xlu0 %172
  %vm174 = vcmask 121856
  %v175 = vsel %vm174, %v169, %v171
  %v176 = vsel %vm174, %v171, %v173
  %179 = vst [vmem:[#allocation3 + $0x20] sm:$0xf] %v175
  %180 = vst [vmem:[#allocation3 + $0x28] sm:$0xf] %v176
  %v181 = vrot.slane %v106, 4
  %v182 = vrot.slane %v107, 4
  %v183 = vrot.slane %v108, 4
  %184 = vrot.lane.b32.xlu0 %v181, 1
  %v185 = vpop.permute.xlu0 %184
  %186 = vrot.lane.b32.xlu0 %v182, 1
  %v187 = vpop.permute.xlu0 %186
  %188 = vrot.lane.b32.xlu0 %v183, 1
  %v189 = vpop.permute.xlu0 %188
  %vm190 = vcmask 7168
  %v191 = vsel %vm190, %v185, %v187
  %v192 = vsel %vm190, %v187, %v189
  %195 = vst [vmem:[#allocation3 + $0x20] sm:$0xf0] %v191
  %196 = vst [vmem:[#allocation3 + $0x28] sm:$0xf0] %v192
  %v197 = vrot.slane %v25, 4
  %v198 = vrot.slane %v26, 4
  %v199 = vsel %vm17, %v197, %v198
  %v201 = vcombine.high %v199, %v199
  %203 = vst [vmem:[#allocation3 + $0x40] sm:$0xf] %v199
  %204 = vst [vmem:[#allocation3 + $0x48] sm:$0xf] %v201
  %v206 = vrot.slane %v127, 4
  %v207 = vrot.slane %v128, 4
  %v208 = vrot.slane %v129, 4
  %209 = vrot.lane.b32.xlu0 %v206, 127
  %v210 = vpop.permute.xlu0 %209
  %211 = vrot.lane.b32.xlu0 %v207, 127
  %v212 = vpop.permute.xlu0 %211
  %213 = vrot.lane.b32.xlu0 %v208, 127
  %v214 = vpop.permute.xlu0 %213
  %vm215 = vcmask 1039360
  %v216 = vsel %vm215, %v210, %v212
  %v217 = vsel %vm215, %v212, %v214
  %220 = vst [vmem:[#allocation3 + $0x40] sm:$0xf0] %v216
  %221 = vst [vmem:[#allocation3 + $0x48] sm:$0xf0] %v217
  %223 = vrot.lane.b32.xlu0 %v107, 113
  %v224 = vpop.permute.xlu0 %223
  %225 = vrot.lane.b32.xlu0 %v108, 113
  %v226 = vpop.permute.xlu0 %225
  %227 = vrot.lane.b32.xlu0 %v109, 113
  %v228 = vpop.permute.xlu0 %227
  %vm229 = vcmask 924672
  %v230 = vsel %vm229, %v224, %v226
  %v231 = vsel %vm229, %v226, %v228
  %234 = vst [vmem:[#allocation3 + $0x60] sm:$0xf] %v230
  %235 = vst [vmem:[#allocation3 + $0x68] sm:$0xf] %v231
  %236 = vrot.lane.b32.xlu0 %v25, 112
  %v237 = vpop.permute.xlu0 %236
  %238 = vrot.lane.b32.xlu0 %v26, 112
  %v239 = vpop.permute.xlu0 %238
  %v240 = vrot.slane %v237, 4
  %v241 = vrot.slane %v239, 4
  %v242 = vsel %vm17, %v240, %v241
  %vm243 = vcmask 916480
  %v244 = vsel %vm243, %v242, %v239
  %v246 = vcombine.low %v244, %v244
  %248 = vst [vmem:[#allocation3 + $0x60] sm:$0xf0] %v246
  %249 = vst [vmem:[#allocation3 + $0x68] sm:$0xf0] %v244
  %250 = vrot.lane.b32.xlu0 %v127, 111
  %v251 = vpop.permute.xlu0 %250
  %252 = vrot.lane.b32.xlu0 %v128, 111
  %v253 = vpop.permute.xlu0 %252
  %254 = vrot.lane.b32.xlu0 %v129, 111
  %v255 = vpop.permute.xlu0 %254
  %vm256 = vcmask 908288
  %v257 = vsel %vm256, %v251, %v253
  %v258 = vsel %vm256, %v253, %v255
  %261 = vst [vmem:[#allocation3 + $0x80] sm:$0xf] %v257
  %262 = vst [vmem:[#allocation3 + $0x88] sm:$0xf] %v258
  %266 = vrot.lane.b32.xlu0 %v110, 17
  %v267 = vpop.permute.xlu0 %266
  %268 = vrot.lane.b32.xlu0 %v111, 17
  %v269 = vpop.permute.xlu0 %268
  %270 = vrot.lane.b32.xlu0 %v112, 17
  %v271 = vpop.permute.xlu0 %270
  %v272 = vsel %vm143, %v267, %v269
  %v273 = vsel %vm143, %v269, %v271
  %276 = vst [vmem:[#allocation3 + $0x10] sm:$0xf] %v272
  %277 = vst [vmem:[#allocation3 + $0x18] sm:$0xf] %v273
  %v278 = vcombine.low %v27, %v27
  %v279 = vcombine.low %v28, %v28
  %280 = vrot.lane.b32.xlu0 %v278, 16
  %v281 = vpop.permute.xlu0 %280
  %282 = vrot.lane.b32.xlu0 %v27, 16
  %v283 = vpop.permute.xlu0 %282
  %284 = vrot.lane.b32.xlu0 %v279, 16
  %v285 = vpop.permute.xlu0 %284
  %v286 = vsel %vm158, %v281, %v283
  %v287 = vsel %vm158, %v283, %v285
  %290 = vst [vmem:[#allocation3 + $0x10] sm:$0xf0] %v286
  %291 = vst [vmem:[#allocation3 + $0x18] sm:$0xf0] %v287
  %295 = vrot.lane.b32.xlu0 %v130, 15
  %v296 = vpop.permute.xlu0 %295
  %297 = vrot.lane.b32.xlu0 %v131, 15
  %v298 = vpop.permute.xlu0 %297
  %299 = vrot.lane.b32.xlu0 %v132, 15
  %v300 = vpop.permute.xlu0 %299
  %v301 = vsel %vm174, %v296, %v298
  %v302 = vsel %vm174, %v298, %v300
  %305 = vst [vmem:[#allocation3 + $0x30] sm:$0xf] %v301
  %306 = vst [vmem:[#allocation3 + $0x38] sm:$0xf] %v302
  %v307 = vrot.slane %v110, 4
  %v308 = vrot.slane %v111, 4
  %v309 = vrot.slane %v112, 4
  %310 = vrot.lane.b32.xlu0 %v307, 1
  %v311 = vpop.permute.xlu0 %310
  %312 = vrot.lane.b32.xlu0 %v308, 1
  %v313 = vpop.permute.xlu0 %312
  %314 = vrot.lane.b32.xlu0 %v309, 1
  %v315 = vpop.permute.xlu0 %314
  %v316 = vsel %vm190, %v311, %v313
  %v317 = vsel %vm190, %v313, %v315
  %320 = vst [vmem:[#allocation3 + $0x30] sm:$0xf0] %v316
  %321 = vst [vmem:[#allocation3 + $0x38] sm:$0xf0] %v317
  %v322 = vrot.slane %v27, 4
  %v323 = vrot.slane %v28, 4
  %v324 = vsel %vm17, %v322, %v323
  %v326 = vcombine.high %v324, %v324
  %328 = vst [vmem:[#allocation3 + $0x50] sm:$0xf] %v324
  %329 = vst [vmem:[#allocation3 + $0x58] sm:$0xf] %v326
  %v331 = vrot.slane %v131, 4
  %v332 = vrot.slane %v132, 4
  %v333 = vrot.slane %v133, 4
  %334 = vrot.lane.b32.xlu0 %v331, 127
  %v335 = vpop.permute.xlu0 %334
  %336 = vrot.lane.b32.xlu0 %v332, 127
  %v337 = vpop.permute.xlu0 %336
  %338 = vrot.lane.b32.xlu0 %v333, 127
  %v339 = vpop.permute.xlu0 %338
  %v340 = vsel %vm215, %v335, %v337
  %v341 = vsel %vm215, %v337, %v339
  %344 = vst [vmem:[#allocation3 + $0x50] sm:$0xf0] %v340
  %345 = vst [vmem:[#allocation3 + $0x58] sm:$0xf0] %v341
  %347 = vrot.lane.b32.xlu0 %v111, 113
  %v348 = vpop.permute.xlu0 %347
  %349 = vrot.lane.b32.xlu0 %v112, 113
  %v350 = vpop.permute.xlu0 %349
  %351 = vrot.lane.b32.xlu0 %v113, 113
  %v352 = vpop.permute.xlu0 %351
  %v353 = vsel %vm229, %v348, %v350
  %v354 = vsel %vm229, %v350, %v352
  %357 = vst [vmem:[#allocation3 + $0x70] sm:$0xf] %v353
  %358 = vst [vmem:[#allocation3 + $0x78] sm:$0xf] %v354
  %359 = vrot.lane.b32.xlu0 %v27, 112
  %v360 = vpop.permute.xlu0 %359
  %361 = vrot.lane.b32.xlu0 %v28, 112
  %v362 = vpop.permute.xlu0 %361
  %v363 = vrot.slane %v360, 4
  %v364 = vrot.slane %v362, 4
  %v365 = vsel %vm17, %v363, %v364
  %v366 = vsel %vm243, %v365, %v362
  %v368 = vcombine.low %v366, %v366
  %370 = vst [vmem:[#allocation3 + $0x70] sm:$0xf0] %v368
  %371 = vst [vmem:[#allocation3 + $0x78] sm:$0xf0] %v366
  %372 = vrot.lane.b32.xlu0 %v131, 111
  %v373 = vpop.permute.xlu0 %372
  %374 = vrot.lane.b32.xlu0 %v132, 111
  %v375 = vpop.permute.xlu0 %374
  %376 = vrot.lane.b32.xlu0 %v133, 111
  %v377 = vpop.permute.xlu0 %376
  %v378 = vsel %vm256, %v373, %v375
  %v379 = vsel %vm256, %v375, %v377
  %382 = vst [vmem:[#allocation3 + $0x90] sm:$0xf] %v378
  %383 = vst [vmem:[#allocation3 + $0x98] sm:$0xf] %v379
  %v384 = vld [vmem:[%s1] sm:$0xf]
  %v385 = vld [vmem:[#allocation3] sm:$0xff]
  %v386 = vld [vmem:[#allocation3 + $0x8] sm:$0xff]
  %v387 = vld [vmem:[#allocation3 + $0x10] sm:$0xff]
  %v388 = vld [vmem:[#allocation3 + $0x18] sm:$0xff]
  %v389 = vld [vmem:[#allocation3 + $0x20] sm:$0xff]
  %v390 = vld [vmem:[#allocation3 + $0x28] sm:$0xff]
  %v391 = vld [vmem:[#allocation3 + $0x30] sm:$0xff]
  %v392 = vld [vmem:[#allocation3 + $0x38] sm:$0xff]
  %v393 = vld [vmem:[#allocation3 + $0x40] sm:$0xff]
  %v394 = vld [vmem:[#allocation3 + $0x48] sm:$0xff]
  %v395 = vld [vmem:[#allocation3 + $0x50] sm:$0xff]
  %v396 = vld [vmem:[#allocation3 + $0x58] sm:$0xff]
  %v397 = vld [vmem:[#allocation3 + $0x60] sm:$0xff]
  %v398 = vld [vmem:[#allocation3 + $0x68] sm:$0xff]
  %v399 = vld [vmem:[#allocation3 + $0x70] sm:$0xff]
  %v400 = vld [vmem:[#allocation3 + $0x78] sm:$0xff]
  %v401 = vld [vmem:[#allocation3 + $0x80] sm:$0xf]
  %v402 = vld [vmem:[#allocation3 + $0x88] sm:$0xf]
  %v403 = vld [vmem:[#allocation3 + $0x90] sm:$0xf]
  %v404 = vld [vmem:[#allocation3 + $0x98] sm:$0xf]
  %vm405 = vcmask 293888
  %v407 = vsel %vm405, %v384, 0
  %v410 = vsel %vm17, %v401, 0
  %v413 = vsel %vm17, %v402, 0
  %v416 = vsel %vm17, %v403, 0
  %v419 = vsel %vm17, %v404, 0
  %421 = vmatprep.subr.mxu0 %v386
  %422 = vmatpush1.msra.mxu0 %v385
  %423 = vmatprep.subr.mxu0 %v390
  %424 = vmatpush1.msra.mxu0 %v389
  %425 = vmatprep.subr.mxu0 %v394
  %426 = vmatpush1.msra.mxu0 %v393
  %427 = vmatprep.subr.mxu0 %v398
  %428 = vmatpush1.msra.mxu0 %v397
  %429 = vmatprep.subr.mxu0 %v413
  %430 = vmatpush1.msra.mxu0 %v410
  %431 = vmatprep.subr.mxu0 0.0
  %432 = vmatpush1.msra.mxu0 0.0
  %433 = vmatprep.subr.mxu0 0.0
  %434 = vmatpush1.msra.mxu0 0.0
  %435 = vmatprep.subr.mxu0 0.0
  %436 = vmatpush1.msra.mxu0 0.0
  %437 = vmatprep.subr.mxu0 0.0
  %438 = vmatpush1.msra.mxu0 0.0
  %439 = vmatprep.subr.mxu0 0.0
  %440 = vmatpush1.msra.mxu0 0.0
  %441 = vmatprep.subr.mxu0 0.0
  %442 = vmatpush1.msra.mxu0 0.0
  %443 = vmatprep.subr.mxu0 0.0
  %444 = vmatpush1.msra.mxu0 0.0
  %445 = vmatprep.subr.mxu0 0.0
  %446 = vmatpush1.msra.mxu0 0.0
  %447 = vmatprep.subr.mxu0 0.0
  %448 = vmatpush1.msra.mxu0 0.0
  %449 = vmatprep.subr.mxu0 0.0
  %450 = vmatpush1.msra.mxu0 0.0
  %451 = vmatprep.subr.mxu0 0.0
  %452 = vmatpush1.msra.mxu0 0.0
  %453 = vmatprep.subr.mxu0 0.0
  %454 = vmatpush1.msra.mxu0 0.0
  %455 = vmatprep.subr.mxu0 0.0
  %456 = vmatpush1.msra.mxu0 0.0
  %457 = vmatprep.subr.mxu0 0.0
  %458 = vmatpush1.msra.mxu0 0.0
  %459 = vmatprep.subr.mxu0 0.0
  %460 = vmatpush1.msra.mxu0 0.0
  %461 = vmatprep.subr.mxu0 0.0
  %462 = vmatpush1.msra.mxu0 0.0
  %463 = vmatprep.subr.mxu0 0.0
  %464 = vmatpush1.msra.mxu0 0.0
  %465 = vmatprep.subr.mxu0 0.0
  %466 = vmatpush1.msra.mxu0 0.0
  %467 = vmatprep.subr.mxu0 0.0
  %468 = vmatpush1.msra.mxu0 0.0
  %469 = vmatprep.subr.mxu0 0.0
  %470 = vmatpush1.msra.mxu0 0.0
  %471 = vmatprep.subr.mxu0 0.0
  %472 = vmatpush1.msra.mxu0 0.0
  %473 = vmatprep.subr.mxu0 0.0
  %474 = vmatpush1.msra.mxu0 0.0
  %475 = vmatprep.subr.mxu0 0.0
  %476 = vmatpush1.msra.mxu0 0.0
  %477 = vmatprep.subr.mxu0 0.0
  %478 = vmatpush1.msra.mxu0 0.0
  %479 = vmatprep.subr.mxu0 0.0
  %480 = vmatpush1.msra.mxu0 0.0
  %481 = vmatprep.subr.mxu0 0.0
  %482 = vmatpush1.msra.mxu0 0.0
  %483 = vmatprep.subr.mxu0 0.0
  %484 = vmatpush1.msra.mxu0 0.0
  %485 = vmatprep.mubr.f32.mxu0 0.0
  %486 = vmatmul.mubr.f32.gmra.mrb[0].mxu0 %v407
  %v487 = vpop.f32.mrb[0].mxu0
  %v488 = vadd.f32 0.0, %v487
  %v489 = vpop.f32.mrb[0].mxu0
  %v490 = vadd.f32 0.0, %v489
  %491 = vdwg.mxu0
  %492 = vmatprep.subr.mxu0 %v388
  %493 = vmatpush1.msra.mxu0 %v387
  %494 = vmatprep.subr.mxu0 %v392
  %495 = vmatpush1.msra.mxu0 %v391
  %496 = vmatprep.subr.mxu0 %v396
  %497 = vmatpush1.msra.mxu0 %v395
  %498 = vmatprep.subr.mxu0 %v400
  %499 = vmatpush1.msra.mxu0 %v399
  %500 = vmatprep.subr.mxu0 %v419
  %501 = vmatpush1.msra.mxu0 %v416
  %502 = vmatprep.subr.mxu0 0.0
  %503 = vmatpush1.msra.mxu0 0.0
  %504 = vmatprep.subr.mxu0 0.0
  %505 = vmatpush1.msra.mxu0 0.0
  %506 = vmatprep.subr.mxu0 0.0
  %507 = vmatpush1.msra.mxu0 0.0
  %508 = vmatprep.subr.mxu0 0.0
  %509 = vmatpush1.msra.mxu0 0.0
  %510 = vmatprep.subr.mxu0 0.0
  %511 = vmatpush1.msra.mxu0 0.0
  %512 = vmatprep.subr.mxu0 0.0
  %513 = vmatpush1.msra.mxu0 0.0
  %514 = vmatprep.subr.mxu0 0.0
  %515 = vmatpush1.msra.mxu0 0.0
  %516 = vmatprep.subr.mxu0 0.0
  %517 = vmatpush1.msra.mxu0 0.0
  %518 = vmatprep.subr.mxu0 0.0
  %519 = vmatpush1.msra.mxu0 0.0
  %520 = vmatprep.subr.mxu0 0.0
  %521 = vmatpush1.msra.mxu0 0.0
  %522 = vmatprep.subr.mxu0 0.0
  %523 = vmatpush1.msra.mxu0 0.0
  %524 = vmatprep.subr.mxu0 0.0
  %525 = vmatpush1.msra.mxu0 0.0
  %526 = vmatprep.subr.mxu0 0.0
  %527 = vmatpush1.msra.mxu0 0.0
  %528 = vmatprep.subr.mxu0 0.0
  %529 = vmatpush1.msra.mxu0 0.0
  %530 = vmatprep.subr.mxu0 0.0
  %531 = vmatpush1.msra.mxu0 0.0
  %532 = vmatprep.subr.mxu0 0.0
  %533 = vmatpush1.msra.mxu0 0.0
  %534 = vmatprep.subr.mxu0 0.0
  %535 = vmatpush1.msra.mxu0 0.0
  %536 = vmatprep.subr.mxu0 0.0
  %537 = vmatpush1.msra.mxu0 0.0
  %538 = vmatprep.subr.mxu0 0.0
  %539 = vmatpush1.msra.mxu0 0.0
  %540 = vmatprep.subr.mxu0 0.0
  %541 = vmatpush1.msra.mxu0 0.0
  %542 = vmatprep.subr.mxu0 0.0
  %543 = vmatpush1.msra.mxu0 0.0
  %544 = vmatprep.subr.mxu0 0.0
  %545 = vmatpush1.msra.mxu0 0.0
  %546 = vmatprep.subr.mxu0 0.0
  %547 = vmatpush1.msra.mxu0 0.0
  %548 = vmatprep.subr.mxu0 0.0
  %549 = vmatpush1.msra.mxu0 0.0
  %550 = vmatprep.subr.mxu0 0.0
  %551 = vmatpush1.msra.mxu0 0.0
  %552 = vmatprep.subr.mxu0 0.0
  %553 = vmatpush1.msra.mxu0 0.0
  %554 = vmatprep.subr.mxu0 0.0
  %555 = vmatpush1.msra.mxu0 0.0
  %556 = vmatprep.mubr.f32.mxu0 0.0
  %557 = vmatmul.mubr.f32.gmra.mrb[0].mxu0 %v407
  %v558 = vpop.f32.mrb[0].mxu0
  %v559 = vadd.f32 0.0, %v558
  %v560 = vpop.f32.mrb[0].mxu0
  %v561 = vadd.f32 0.0, %v560
  %562 = vdwg.mxu0
  %v563 = vld [vmem:[%s2] sm:$0xf]
  %565 = vset.pattern.permute.xlu0 0
  %566 = vperm.xlu0 %565, %v563
  %v567 = vpop.permute.xlu0 %566
  %v569 = vadd.f32 %v488, %v567
  %v570 = vadd.f32 %v490, %v567
  %v572 = vcombine.high %v14, %v14
  %v574 = vadd.f32 %v569, %v14
  %v575 = vadd.f32 %v570, %v572
  %v578 = vcombine.low %v574, %v575
  %580 = vst [vmem:[%s3] sm:$0xff] %v578
  %v581 = vadd.f32 %v559, %v567
  %v582 = vadd.f32 %v561, %v567
  %v584 = vcombine.high %v15, %v15
  %v586 = vadd.f32 %v581, %v15
  %v587 = vadd.f32 %v582, %v584
  %v590 = vcombine.low %v586, %v587
  %s592 = scalar_lea.vmem %s3, 8
  %593 = vst [vmem:[%s592] sm:$0xff] %v590
  // Predicated region
  $region14: #{base_res_layer.1} parent=0 // pred_check
    _
  $region15: #{base_res_layer.1} parent=0 // pred_check_branch
    %595 = sbr.rel (0) target = $region17
  $region16: #{base_res_layer.1} parent=0 // pred_region
    _
  $region17: #{base_res_layer.1} parent=0 // pred_fallthru
    _
  // Predicated region
  $region18: #{base_res_layer.1} parent=0 // pred_check
    _
  $region19: #{base_res_layer.1} parent=0 // pred_check_branch
    %597 = sbr.rel (0) target = $region21
  $region20: #{base_res_layer.1} parent=0 // pred_region
    _
  $region21: #{base_res_layer.1} parent=0 // pred_fallthru
    _

</llo_original>
